<compile_context>
chip_gen: v7x
topology: tpu7x:2x2x1
jax: 0.10.0
libtpu: 0.0.40
codegen_flags: <defaults>
</compile_context>

<pallas_src>
import functools
import math

import jax
import jax.numpy as jnp
from jax.experimental import pallas as pl
from jax.experimental.pallas import tpu as pltpu

_LANE = 128
# ~4 MiB per input/output tile; double-buffered in+out => ~16 MiB VMEM.
_TARGET_BLOCK_BYTES = 4 * 1024 * 1024
_VMEM_LIMIT_BYTES = 32 * 1024 * 1024


def _sublane_multiple(dtype) -> int:
    # Packed-sublane granularity: 8 rows (32-bit), 16 (16-bit), 32 (8-bit).
    return max(8, 32 // jnp.dtype(dtype).itemsize)


def _exp_bijector_kernel(x_ref, o_ref, *, min_input, max_input):
    # Compute in f32 (required on v5e, which lacks bf16 VPU/EUP; the casts ride
    # free VPU slots in this HBM-bound kernel). Integer/bool inputs are upcast
    # here too, saving a wrapper-side cast pass over HBM.
    x = x_ref[...].astype(jnp.float32)
    o_ref[...] = jnp.exp(jnp.clip(x, min_input, max_input)).astype(o_ref.dtype)


def _pick_width(n: int) -> int:
    for w in (1024, 512, 256):
        if n % w == 0:
            return w
    return _LANE


def _run_tiled(x2d, min_input, max_input, out_dtype):
    """Run the clamp+exp kernel over a lane-dense (rows, width) slab."""
    rows, width = x2d.shape
    in_size = jnp.dtype(x2d.dtype).itemsize
    out_size = jnp.dtype(out_dtype).itemsize
    sub = max(_sublane_multiple(x2d.dtype), _sublane_multiple(out_dtype))

    # Rows per block targeting ~_TARGET_BLOCK_BYTES for the larger of the
    # in/out buffers; keep it a packed-sublane multiple.
    per_row_bytes = width * max(in_size, out_size)
    target_rows = max(sub, (_TARGET_BLOCK_BYTES // per_row_bytes) // sub * sub)

    if rows > target_rows:
        block_rows = target_rows          # cdiv grid tolerates a partial tail
    elif rows > max(target_rows // 2, 2 * sub):
        # Medium input: force >= 2 grid steps so both v7x TensorCores stream.
        half = -(-rows // 2)
        block_rows = -(-half // sub) * sub
    else:
        block_rows = rows                 # single step, block == full extent
    grid = (pl.cdiv(rows, block_rows),)

    n = rows * width
    kernel = functools.partial(
        _exp_bijector_kernel, min_input=min_input, max_input=max_input
    )
    return pl.pallas_call(
        kernel,
        out_shape=jax.ShapeDtypeStruct((rows, width), out_dtype),
        grid_spec=pltpu.PrefetchScalarGridSpec(
            num_scalar_prefetch=0,
            grid=grid,
            in_specs=[pl.BlockSpec((block_rows, width), lambda i: (i, 0))],
            out_specs=pl.BlockSpec((block_rows, width), lambda i: (i, 0)),
        ),
        compiler_params=pltpu.CompilerParams(
            dimension_semantics=("parallel",),
            vmem_limit_bytes=_VMEM_LIMIT_BYTES,
        ),
        cost_estimate=pl.CostEstimate(
            flops=2 * n,                      # clamp (two compares) per element
            transcendentals=n,                # one exp per element
            bytes_accessed=n * (in_size + out_size),
        ),
    )(x2d)


class ExponentialBijector:
    """JAX/Pallas port of cusrl ExponentialBijector (forward pass)."""

    def __init__(self, min_value: float = 0.01, max_value: float = 1.0):
        self.min_value, self.max_value = min_value, max_value
        # Mirrors the torch module: self.min_input = self.inverse(min_value), etc.
        self.min_input = math.log(min(max(min_value, min_value), max_value))
        self.max_input = math.log(min(max(max_value, min_value), max_value))

    # ---- forward ----------------------------------------------------------
    def forward(self, x):
        if not isinstance(x, jax.Array):
            # python-float branch of the torch module
            return math.exp(min(max(float(x), self.min_input), self.max_input))

        orig_shape = x.shape
        is_float = jnp.issubdtype(x.dtype, jnp.floating)
        # Integer/bool inputs: cast happens inside the kernel; result is f32
        # (torch.exp would reject integer tensors — documented deviation).
        out_dtype = x.dtype if is_float else jnp.float32

        n = int(x.size)
        if n == 0:
            return jnp.zeros(orig_shape, out_dtype)

        if n % _LANE == 0:
            # Fast path: pure reshape (free metadata op) into a lane-dense slab.
            width = _pick_width(n)
            out2d = _run_tiled(
                x.reshape(n // width, width), self.min_input, self.max_input,
                out_dtype,
            )
            return out2d.reshape(orig_shape)

        # Ragged size: kernel on the 128-aligned prefix, plain-jnp on the
        # <128-element tail — no whole-array pad/slice HBM round trips.
        flat = jnp.ravel(x)
        aligned = (n // _LANE) * _LANE
        tail = flat[aligned:]
        tail_out = jnp.exp(
            jnp.clip(tail.astype(jnp.float32), self.min_input, self.max_input)
        ).astype(out_dtype)
        if aligned == 0:
            return tail_out.reshape(orig_shape)
        width = _pick_width(aligned)
        prefix_out = _run_tiled(
            flat[:aligned].reshape(aligned // width, width),
            self.min_input, self.max_input, out_dtype,
        )
        return jnp.concatenate([prefix_out.reshape(-1), tail_out]).reshape(orig_shape)

    def __call__(self, x):
        return self.forward(x)

    # ---- inverse (plain JAX; trivial elementwise, no kernel needed) --------
    def inverse(self, x):
        if not isinstance(x, jax.Array):
            return math.log(min(max(float(x), self.min_value), self.max_value))
        return jnp.log(jnp.clip(x, self.min_value, self.max_value))

    def __repr__(self):
        return f"ExponentialBijector(min={self.min_value}, max={self.max_value})"


if __name__ == "__main__":
    key = jax.random.PRNGKey(0)
    bij = ExponentialBijector(min_value=0.01, max_value=1.0)

    # --- primary check: f32, 128-aligned fast path (2*4*16*16 = 2048 elems) --
    x = jax.random.normal(key, (2, 4, 16, 16), dtype=jnp.float32) * 3.0
    y = jax.block_until_ready(bij(x))
    ref = jnp.exp(jnp.clip(x, bij.min_input, bij.max_input))
    assert y.shape == x.shape and y.dtype == x.dtype
    assert jnp.allclose(y, ref, rtol=1e-6, atol=1e-6), "f32 mismatch vs reference"

    # --- bf16 check: dtype preserved end-to-end (no f32 HBM staging) ---------
    x_bf = x.astype(jnp.bfloat16)
    y_bf = jax.block_until_ready(bij(x_bf))
    ref_bf = jnp.exp(
        jnp.clip(x_bf.astype(jnp.float32), bij.min_input, bij.max_input)
    ).astype(jnp.bfloat16)
    assert y_bf.dtype == jnp.bfloat16
    assert jnp.allclose(
        y_bf.astype(jnp.float32), ref_bf.astype(jnp.float32), rtol=2e-2, atol=2e-2
    ), "bf16 mismatch vs reference"

    # --- int check: cast to f32 happens inside the kernel --------------------
    x_int = (jnp.arange(256, dtype=jnp.int32) - 128).reshape(16, 16)
    y_int = jax.block_until_ready(bij(x_int))
    ref_int = jnp.exp(
        jnp.clip(x_int.astype(jnp.float32), bij.min_input, bij.max_input)
    )
    assert y_int.dtype == jnp.float32
    assert jnp.allclose(y_int, ref_int, rtol=1e-6, atol=1e-6), "int mismatch"

    # --- ragged check: size not a multiple of 128 (prefix-kernel + jnp tail) -
    xr = jax.random.normal(jax.random.PRNGKey(1), (7, 33), dtype=jnp.float32) * 3.0
    yr = jax.block_until_ready(bij(xr))
    refr = jnp.exp(jnp.clip(xr, bij.min_input, bij.max_input))
    assert yr.shape == xr.shape
    assert jnp.allclose(yr, refr, rtol=1e-6, atol=1e-6), "ragged mismatch vs reference"

    # --- python-float branch --------------------------------------------------
    yf = bij(0.5)
    assert abs(yf - math.exp(min(max(0.5, bij.min_input), bij.max_input))) < 1e-12

    print("KERNEL_OK")
</pallas_src>

<mosaic_0001>
module attributes {stable_mosaic.version = 11 : i64} {
  func.func @_exp_bijector_kernel(%arg0: i32, %arg1: memref<2x1024xf32, #tpu.memory_space<vmem>>, %arg2: memref<2x1024xf32, #tpu.memory_space<vmem>>) attributes {dimension_semantics = [#tpu.dimension_semantics<parallel>], iteration_bounds = array<i64: 1>, scalar_prefetch = 0 : i64, scratch_operands = 0 : i64, tpu.core_type = #tpu.core_type<tc>, window_params = [{transform_indices = @transform_0, window_bounds = array<i64: 2, 1024>}, {transform_indices = @transform_1, window_bounds = array<i64: 2, 1024>}]} {
    %c0 = arith.constant 0 : index
    %c0_0 = arith.constant 0 : index
    %0 = vector.load %arg1[%c0, %c0_0] : memref<2x1024xf32, #tpu.memory_space<vmem>>, vector<2x1024xf32>
    %cst = arith.constant -4.60517025 : f32
    %cst_1 = arith.constant 0.000000e+00 : f32
    %1 = vector.broadcast %cst : f32 to vector<2x1024xf32>
    %2 = arith.maximumf %1, %0 : vector<2x1024xf32>
    %3 = vector.broadcast %cst_1 : f32 to vector<2x1024xf32>
    %4 = arith.minimumf %3, %2 : vector<2x1024xf32>
    %5 = math.exp %4 : vector<2x1024xf32>
    %c0_2 = arith.constant 0 : index
    %c0_3 = arith.constant 0 : index
    %6 = vector.load %arg2[%c0_2, %c0_3] : memref<2x1024xf32, #tpu.memory_space<vmem>>, vector<2x1024xf32>
    tpu.vector_store %arg2[%c0_2, %c0_3], %5 {strides = array<i32>} : memref<2x1024xf32, #tpu.memory_space<vmem>>, vector<2x1024xf32>,
    return
  }
  func.func @transform_0(%arg0: i32) -> (i32, i32) {
    %c0_i32 = arith.constant 0 : i32
    %c0_i32_0 = arith.constant 0 : i32
    return %arg0, %c0_i32 : i32, i32
  }
  func.func @transform_1(%arg0: i32) -> (i32, i32) {
    %c0_i32 = arith.constant 0 : i32
    %c0_i32_0 = arith.constant 0 : i32
    return %arg0, %c0_i32 : i32, i32
  }
}

</mosaic_0001>

<llo_original>
// kernel: tpu_custom_call.1
$region0: #{tpu_custom_call.1}
  #allocation0 [shape = 'u32[]', space=smem, size = 0x4, offset = 0x4, fixed_abs, tag = 'smem constant byte address 0x4 - core index']
  #allocation1 [shape = 'u32[144,128]{1,0:T(1,128)}', space=vmem, size = 0x12000, scoped, tag = 'internal scratch']
  %s0 = inlined_call_operand.hbm [shape: f32[2,1024], index: 0, kind: input, shape index: {}]
  %s1 = inlined_call_operand.hbm [shape: f32[2,1024], index: 1, kind: output, shape index: {}]
  %s2 = sld [smem:[#allocation0]]
  $region18: #{tpu_custom_call.1} parent=0
    _
  %s4 = ssub.s32 1, %s2
  %s5 = scalar_select 0, %s4, %s2
  $region1: #{tpu_custom_call.1} parent=0
    #allocation2 [shape = 'u8[8192]{0}', space=vmem, size = 0x2000, scoped, tag = 'input window, operand 0, single buffered']
    #allocation3 [shape = 's32[1]{0}', space=sflag, size = 0x4, scoped, tag = 'scoped memory for tpu_custom_call.1']
    #allocation4 [shape = 's32[1]{0}', space=sflag, size = 0x4, scoped, tag = 'scoped memory for tpu_custom_call.1']
    #allocation5 [shape = 'u8[8192]{0}', space=vmem, size = 0x2000, scoped, tag = 'output window, operand 0, single buffered']
    %6 = vsyncpa [#allocation3], 0
    %7 = vsyncpa [#allocation4], 0
    // Predicated region
    $region2: #{tpu_custom_call.1} parent=1 // pred_check
      _
    $region3: #{tpu_custom_call.1} parent=1 // pred_check_branch
      %9 = sbr.rel (0) target = $region5
    $region4: #{tpu_custom_call.1} parent=1 // pred_region
      %s11 = ssub.s32 256, 256
      %12 = vsyncadd [#allocation3], %s11
      %s14 = sshll.u32 [#allocation2], 4
      %s15 = int_to_ptr.vmem [resolvable:$true] %s14
      %17 = dma.hbm_to_vmem [thread:$0]  %s0, 256, %s15, [#allocation3]
    $region5: #{tpu_custom_call.1} parent=1 // pred_fallthru
      _
    // Predicated region
    $region6: #{tpu_custom_call.1} parent=1 // pred_check
      _
    $region7: #{tpu_custom_call.1} parent=1 // pred_check_branch
      %19 = sbr.rel (0) target = $region9
    $region8: #{tpu_custom_call.1} parent=1 // pred_region
      %20 = dma.done [#allocation3], 256
    $region9: #{tpu_custom_call.1} parent=1 // pred_fallthru
      _
    %v21 = vld [vmem:[#allocation2] sm:$0xff]
    %v22 = vld [vmem:[#allocation2 + $0x8] sm:$0xff]
    %v23 = vmax.f32 %v21, -4.6051702
    %v24 = vmax.f32 %v22, -4.6051702
    %v25 = vmin.f32 %v23, 0.0
    %v26 = vmin.f32 %v24, 0.0
    %v27 = vmul.f32 %v25, 1.442695
    %v28 = vpow.pop %v27
    %v29 = vmul.f32 %v26, 1.442695
    %v30 = vpow.pop %v29
    %31 = vst [vmem:[#allocation5] sm:$0xff] %v28
    %32 = vst [vmem:[#allocation5 + $0x8] sm:$0xff] %v30
    // Predicated region
    $region10: #{tpu_custom_call.1} parent=1 // pred_check
      _
    $region11: #{tpu_custom_call.1} parent=1 // pred_check_branch
      %34 = sbr.rel (0) target = $region13
    $region12: #{tpu_custom_call.1} parent=1 // pred_region
      %s36 = ssub.s32 256, 256
      %37 = vsyncadd [#allocation4], %s36
      %s39 = sshll.u32 [#allocation5], 4
      %s40 = int_to_ptr.vmem [resolvable:$true] %s39
      %42 = dma.vmem_to_hbm [thread:$0]  %s40, 256, %s1, [#allocation4]
    $region13: #{tpu_custom_call.1} parent=1 // pred_fallthru
      _
    // Predicated region
    $region14: #{tpu_custom_call.1} parent=1 // pred_check
      _
    $region15: #{tpu_custom_call.1} parent=1 // pred_check_branch
      %44 = sbr.rel (0) target = $region17
    $region16: #{tpu_custom_call.1} parent=1 // pred_region
      %45 = dma.done [#allocation4], 256
    $region17: #{tpu_custom_call.1} parent=1 // pred_fallthru
      _
    %46 = vsyncpa [#allocation3], 1
    %47 = vsyncpa [#allocation4], 1

</llo_original>
